<compile_context>
chip_gen: v5e
topology: v5e:2x2
jax: 0.10.0
libtpu: 0.0.40
codegen_flags: <defaults>
</compile_context>

<pallas_src>
import jax
import jax.numpy as jnp
from jax.experimental import pallas as pl
from jax.experimental.pallas import tpu as pltpu


def _round_up(x, m):
    return ((x + m - 1) // m) * m


def time_feature_kernel(day_ref, week_ref,
                        wd_ref, bd_ref, ww_ref, bw_ref,
                        w1_ref, b1_ref, w2_ref, b2_ref, w_ref, b_ref,
                        o_ref):
    d0 = day_ref[...]                      # (tm, 1)
    d1 = week_ref[...]                     # (tm, 1)

    # Linear(1, D) is an outer-product broadcast; fuse day + week directly.
    x = (d0 * wd_ref[...] + bd_ref[...]) + (d1 * ww_ref[...] + bw_ref[...])  # (tm, Dp)

    h = jnp.dot(x, w1_ref[...], preferred_element_type=jnp.float32) + b1_ref[...]
    h = jnp.maximum(h, 0.0)
    h = jnp.dot(h, w2_ref[...], preferred_element_type=jnp.float32) + b2_ref[...]
    h = jnp.maximum(h, 0.0)
    out = jnp.dot(h, w_ref[...], preferred_element_type=jnp.float32) + b_ref[...]
    o_ref[...] = out.astype(o_ref.dtype)


def _choose_tm(n_rows, d_pad, requested):
    if requested is not None:
        tm = requested
    else:
        # 512 rows amortizes per-step overhead and more than fills the
        # 256-wide v6e/v7x MXU; back off to 256 when D is large (VMEM).
        tm = 256 if d_pad >= 1024 else 512
    tm = max(8, min(tm, _round_up(n_rows, 8)))
    tm = _round_up(tm, 8)
    # Prefer >= 2 grid steps so v7x can shard this axis over both TCs.
    if _round_up(n_rows, tm) // tm < 2 and n_rows > 8:
        tm = _round_up((n_rows + 1) // 2, 8)
    return tm


def time_feature_pallas(eb, params, *, tm=None):
    """eb: (B, T, >=2) float32. Returns (B, T, D) float32."""
    B, T, F = eb.shape
    assert F >= 2
    D = params["w_day"].shape[1]
    N = B * T

    Dp = _round_up(max(D, 128), 128)        # lane-dense / full MXU width
    tm = _choose_tm(N, Dp, tm)
    Npad = _round_up(N, tm)
    grid = Npad // tm

    # Split the two features into separate (Npad, 1) columns (zero-padded rows).
    cols = eb[..., :2].reshape(N, 2).astype(jnp.float32)
    day_col = jnp.zeros((Npad, 1), jnp.float32).at[:N, 0].set(cols[:, 0])
    week_col = jnp.zeros((Npad, 1), jnp.float32).at[:N, 0].set(cols[:, 1])

    def pad_row(v):   # (1, D) -> (1, Dp)
        return jnp.zeros((1, Dp), jnp.float32).at[:, :D].set(v.astype(jnp.float32))

    def pad_mat(m):   # (D, D) -> (Dp, Dp)
        return jnp.zeros((Dp, Dp), jnp.float32).at[:D, :D].set(m.astype(jnp.float32))

    col_spec = pl.BlockSpec((tm, 1), lambda i: (i, 0))      # per-row features
    row_spec = pl.BlockSpec((1, Dp), lambda i: (0, 0))      # broadcast biases / (1,D) weights
    mat_spec = pl.BlockSpec((Dp, Dp), lambda i: (0, 0))     # (D,D) weights
    out_spec = pl.BlockSpec((tm, Dp), lambda i: (i, 0))

    # Advisory cost estimate for XLA scheduling around the kernel.
    flops = 3 * 2 * Npad * Dp * Dp + 4 * Npad * Dp
    bytes_accessed = (2 * Npad * 4                # day / week columns
                      + (3 * Dp * Dp + 7 * Dp) * 4  # weights + biases
                      + Npad * Dp * 4)            # output
    cost = pl.CostEstimate(flops=flops, transcendentals=0,
                           bytes_accessed=bytes_accessed)

    # VMEM budget: double-buffered inputs/weights/output + intermediate headroom.
    vmem_bytes = 4 * (2 * (2 * tm)
                      + 2 * (3 * Dp * Dp + 7 * Dp)
                      + 2 * (tm * Dp)
                      + 6 * (tm * Dp))
    vmem_limit = int(min(max(vmem_bytes, 16 * 1024 * 1024), 64 * 1024 * 1024))

    out = pl.pallas_call(
        time_feature_kernel,
        out_shape=jax.ShapeDtypeStruct((Npad, Dp), jnp.float32),
        grid_spec=pltpu.PrefetchScalarGridSpec(
            num_scalar_prefetch=0,
            grid=(grid,),
            in_specs=[
                col_spec, col_spec,                 # day, week columns
                row_spec, row_spec,                 # w_day, b_day
                row_spec, row_spec,                 # w_week, b_week
                mat_spec, row_spec,                 # ln1: W1, b1
                mat_spec, row_spec,                 # ln2: W2, b2
                mat_spec, row_spec,                 # ln:  W,  b
            ],
            out_specs=out_spec,
        ),
        compiler_params=pltpu.CompilerParams(
            dimension_semantics=("parallel",),
            vmem_limit_bytes=vmem_limit),
        cost_estimate=cost,
    )(day_col, week_col,
      pad_row(params["w_day"]), pad_row(params["b_day"]),
      pad_row(params["w_week"]), pad_row(params["b_week"]),
      pad_mat(params["w1"]), pad_row(params["b1"]),
      pad_mat(params["w2"]), pad_row(params["b2"]),
      pad_mat(params["w"]), pad_row(params["b"]))

    return out[:N, :D].reshape(B, T, D)


def time_feature_ref(eb, params):
    """Pure-JAX reference matching the PyTorch forward exactly."""
    day = eb[:, :, 0:1] * params["w_day"][0] + params["b_day"][0]
    week = eb[:, :, 1:2] * params["w_week"][0] + params["b_week"][0]
    x = day + week
    x = jnp.maximum(x @ params["w1"] + params["b1"][0], 0.0)
    x = jnp.maximum(x @ params["w2"] + params["b2"][0], 0.0)
    return x @ params["w"] + params["b"][0]


def time_feature(eb, params, *, tm=None, force_pallas=False):
    """Dispatch: tiny problems go to plain XLA; real shapes use the kernel."""
    B, T, _ = eb.shape
    D = params["w_day"].shape[1]
    if not force_pallas and (B * T < 1024 or D < 128):
        return time_feature_ref(eb, params)
    return time_feature_pallas(eb, params, tm=tm)


def init_params(key, embed_dim):
    """Deterministic synthetic parameters. Linear weights stored as (in, out)."""
    ks = jax.random.split(key, 10)
    s = 0.1
    return {
        # Linear(1, D): weight (D,1) -> stored as (1, D)
        "w_day":  s * jax.random.normal(ks[0], (1, embed_dim), jnp.float32),
        "b_day":  s * jax.random.normal(ks[1], (1, embed_dim), jnp.float32),
        "w_week": s * jax.random.normal(ks[2], (1, embed_dim), jnp.float32),
        "b_week": s * jax.random.normal(ks[3], (1, embed_dim), jnp.float32),
        # Linear(D, D): weight stored transposed as (in, out)
        "w1": s * jax.random.normal(ks[4], (embed_dim, embed_dim), jnp.float32),
        "b1": s * jax.random.normal(ks[5], (1, embed_dim), jnp.float32),
        "w2": s * jax.random.normal(ks[6], (embed_dim, embed_dim), jnp.float32),
        "b2": s * jax.random.normal(ks[7], (1, embed_dim), jnp.float32),
        "w":  s * jax.random.normal(ks[8], (embed_dim, embed_dim), jnp.float32),
        "b":  s * jax.random.normal(ks[9], (1, embed_dim), jnp.float32),
    }


if __name__ == "__main__":
    key = jax.random.PRNGKey(0)
    k_eb, k_eb2, k_par = jax.random.split(key, 3)

    B, T, D = 2, 8, 32
    params = init_params(k_par, D)

    # Small shape (forces the Pallas path to validate the kernel itself).
    eb = jax.random.normal(k_eb, (B, T, 2), jnp.float32)
    out = jax.block_until_ready(time_feature_pallas(eb, params))
    ref = time_feature_ref(eb, params)
    assert out.shape == (B, T, D)
    assert jnp.allclose(out, ref, atol=1e-5, rtol=1e-5), "mismatch vs reference"

    # Ragged row count (B*T not a multiple of the tile) exercises the padding path.
    eb2 = jax.random.normal(k_eb2, (3, 5, 2), jnp.float32)
    out2 = jax.block_until_ready(time_feature_pallas(eb2, params))
    ref2 = time_feature_ref(eb2, params)
    assert out2.shape == (3, 5, D)
    assert jnp.allclose(out2, ref2, atol=1e-5, rtol=1e-5), "mismatch vs reference (ragged)"

    print("KERNEL_OK")
</pallas_src>

<mosaic_0001>
module attributes {stable_mosaic.version = 11 : i64} {
  func.func @time_feature_kernel(%arg0: i32, %arg1: memref<8x1xf32, #tpu.memory_space<vmem>>, %arg2: memref<8x1xf32, #tpu.memory_space<vmem>>, %arg3: memref<1x128xf32, #tpu.memory_space<vmem>>, %arg4: memref<1x128xf32, #tpu.memory_space<vmem>>, %arg5: memref<1x128xf32, #tpu.memory_space<vmem>>, %arg6: memref<1x128xf32, #tpu.memory_space<vmem>>, %arg7: memref<128x128xf32, #tpu.memory_space<vmem>>, %arg8: memref<1x128xf32, #tpu.memory_space<vmem>>, %arg9: memref<128x128xf32, #tpu.memory_space<vmem>>, %arg10: memref<1x128xf32, #tpu.memory_space<vmem>>, %arg11: memref<128x128xf32, #tpu.memory_space<vmem>>, %arg12: memref<1x128xf32, #tpu.memory_space<vmem>>, %arg13: memref<8x128xf32, #tpu.memory_space<vmem>>) attributes {dimension_semantics = [#tpu.dimension_semantics<parallel>], iteration_bounds = array<i64: 2>, scalar_prefetch = 0 : i64, scratch_operands = 0 : i64, tpu.core_type = #tpu.core_type<tc>, window_params = [{transform_indices = @transform_0, window_bounds = array<i64: 8, 1>}, {transform_indices = @transform_1, window_bounds = array<i64: 8, 1>}, {pipeline_mode = #tpu.pipeline_mode<synchronous>, transform_indices = @transform_2, window_bounds = array<i64: 1, 128>}, {pipeline_mode = #tpu.pipeline_mode<synchronous>, transform_indices = @transform_3, window_bounds = array<i64: 1, 128>}, {pipeline_mode = #tpu.pipeline_mode<synchronous>, transform_indices = @transform_4, window_bounds = array<i64: 1, 128>}, {pipeline_mode = #tpu.pipeline_mode<synchronous>, transform_indices = @transform_5, window_bounds = array<i64: 1, 128>}, {pipeline_mode = #tpu.pipeline_mode<synchronous>, transform_indices = @transform_6, window_bounds = array<i64: 128, 128>}, {pipeline_mode = #tpu.pipeline_mode<synchronous>, transform_indices = @transform_7, window_bounds = array<i64: 1, 128>}, {pipeline_mode = #tpu.pipeline_mode<synchronous>, transform_indices = @transform_8, window_bounds = array<i64: 128, 128>}, {pipeline_mode = #tpu.pipeline_mode<synchronous>, transform_indices = @transform_9, window_bounds = array<i64: 1, 128>}, {pipeline_mode = #tpu.pipeline_mode<synchronous>, transform_indices = @transform_10, window_bounds = array<i64: 128, 128>}, {pipeline_mode = #tpu.pipeline_mode<synchronous>, transform_indices = @transform_11, window_bounds = array<i64: 1, 128>}, {transform_indices = @transform_12, window_bounds = array<i64: 8, 128>}]} {
    %c0 = arith.constant 0 : index
    %c0_0 = arith.constant 0 : index
    %0 = vector.load %arg1[%c0, %c0_0] : memref<8x1xf32, #tpu.memory_space<vmem>>, vector<8x1xf32>
    %c0_1 = arith.constant 0 : index
    %c0_2 = arith.constant 0 : index
    %1 = vector.load %arg2[%c0_1, %c0_2] : memref<8x1xf32, #tpu.memory_space<vmem>>, vector<8x1xf32>
    %c0_3 = arith.constant 0 : index
    %c0_4 = arith.constant 0 : index
    %2 = vector.load %arg3[%c0_3, %c0_4] : memref<1x128xf32, #tpu.memory_space<vmem>>, vector<1x128xf32>
    %3 = vector.broadcast %0 : vector<8x1xf32> to vector<8x128xf32>
    %4 = vector.broadcast %2 : vector<1x128xf32> to vector<8x128xf32>
    %5 = arith.mulf %3, %4 : vector<8x128xf32>
    %c0_5 = arith.constant 0 : index
    %c0_6 = arith.constant 0 : index
    %6 = vector.load %arg4[%c0_5, %c0_6] : memref<1x128xf32, #tpu.memory_space<vmem>>, vector<1x128xf32>
    %7 = vector.broadcast %6 : vector<1x128xf32> to vector<8x128xf32>
    %8 = arith.addf %5, %7 : vector<8x128xf32>
    %c0_7 = arith.constant 0 : index
    %c0_8 = arith.constant 0 : index
    %9 = vector.load %arg5[%c0_7, %c0_8] : memref<1x128xf32, #tpu.memory_space<vmem>>, vector<1x128xf32>
    %10 = vector.broadcast %1 : vector<8x1xf32> to vector<8x128xf32>
    %11 = vector.broadcast %9 : vector<1x128xf32> to vector<8x128xf32>
    %12 = arith.mulf %10, %11 : vector<8x128xf32>
    %c0_9 = arith.constant 0 : index
    %c0_10 = arith.constant 0 : index
    %13 = vector.load %arg6[%c0_9, %c0_10] : memref<1x128xf32, #tpu.memory_space<vmem>>, vector<1x128xf32>
    %14 = vector.broadcast %13 : vector<1x128xf32> to vector<8x128xf32>
    %15 = arith.addf %12, %14 : vector<8x128xf32>
    %16 = arith.addf %8, %15 : vector<8x128xf32>
    %c0_11 = arith.constant 0 : index
    %c0_12 = arith.constant 0 : index
    %17 = vector.load %arg7[%c0_11, %c0_12] : memref<128x128xf32, #tpu.memory_space<vmem>>, vector<128x128xf32>
    %cst = arith.constant dense<0.000000e+00> : vector<8x128xf32>
    %18 = tpu.matmul %16, %17, %cst {dimension_numbers = #tpu.dot_dimension_numbers<[1], [0], [0], [1], [0, 0, 1, 1], [], []>} : vector<8x128xf32>, vector<128x128xf32>, vector<8x128xf32> -> vector<8x128xf32>
    %c0_13 = arith.constant 0 : index
    %c0_14 = arith.constant 0 : index
    %19 = vector.load %arg8[%c0_13, %c0_14] : memref<1x128xf32, #tpu.memory_space<vmem>>, vector<1x128xf32>
    %20 = vector.broadcast %19 : vector<1x128xf32> to vector<8x128xf32>
    %21 = arith.addf %18, %20 : vector<8x128xf32>
    %cst_15 = arith.constant 0.000000e+00 : f32
    %22 = vector.broadcast %cst_15 : f32 to vector<8x128xf32>
    %23 = arith.maximumf %21, %22 : vector<8x128xf32>
    %c0_16 = arith.constant 0 : index
    %c0_17 = arith.constant 0 : index
    %24 = vector.load %arg9[%c0_16, %c0_17] : memref<128x128xf32, #tpu.memory_space<vmem>>, vector<128x128xf32>
    %cst_18 = arith.constant dense<0.000000e+00> : vector<8x128xf32>
    %25 = tpu.matmul %23, %24, %cst_18 {dimension_numbers = #tpu.dot_dimension_numbers<[1], [0], [0], [1], [0, 0, 1, 1], [], []>} : vector<8x128xf32>, vector<128x128xf32>, vector<8x128xf32> -> vector<8x128xf32>
    %c0_19 = arith.constant 0 : index
    %c0_20 = arith.constant 0 : index
    %26 = vector.load %arg10[%c0_19, %c0_20] : memref<1x128xf32, #tpu.memory_space<vmem>>, vector<1x128xf32>
    %27 = vector.broadcast %26 : vector<1x128xf32> to vector<8x128xf32>
    %28 = arith.addf %25, %27 : vector<8x128xf32>
    %cst_21 = arith.constant 0.000000e+00 : f32
    %29 = vector.broadcast %cst_21 : f32 to vector<8x128xf32>
    %30 = arith.maximumf %28, %29 : vector<8x128xf32>
    %c0_22 = arith.constant 0 : index
    %c0_23 = arith.constant 0 : index
    %31 = vector.load %arg11[%c0_22, %c0_23] : memref<128x128xf32, #tpu.memory_space<vmem>>, vector<128x128xf32>
    %cst_24 = arith.constant dense<0.000000e+00> : vector<8x128xf32>
    %32 = tpu.matmul %30, %31, %cst_24 {dimension_numbers = #tpu.dot_dimension_numbers<[1], [0], [0], [1], [0, 0, 1, 1], [], []>} : vector<8x128xf32>, vector<128x128xf32>, vector<8x128xf32> -> vector<8x128xf32>
    %c0_25 = arith.constant 0 : index
    %c0_26 = arith.constant 0 : index
    %33 = vector.load %arg12[%c0_25, %c0_26] : memref<1x128xf32, #tpu.memory_space<vmem>>, vector<1x128xf32>
    %34 = vector.broadcast %33 : vector<1x128xf32> to vector<8x128xf32>
    %35 = arith.addf %32, %34 : vector<8x128xf32>
    %c0_27 = arith.constant 0 : index
    %c0_28 = arith.constant 0 : index
    %36 = vector.load %arg13[%c0_27, %c0_28] : memref<8x128xf32, #tpu.memory_space<vmem>>, vector<8x128xf32>
    tpu.vector_store %arg13[%c0_27, %c0_28], %35 {strides = array<i32>} : memref<8x128xf32, #tpu.memory_space<vmem>>, vector<8x128xf32>,
    return
  }
  func.func @transform_0(%arg0: i32) -> (i32, i32) {
    %c0_i32 = arith.constant 0 : i32
    %c0_i32_0 = arith.constant 0 : i32
    return %arg0, %c0_i32 : i32, i32
  }
  func.func @transform_1(%arg0: i32) -> (i32, i32) {
    %c0_i32 = arith.constant 0 : i32
    %c0_i32_0 = arith.constant 0 : i32
    return %arg0, %c0_i32 : i32, i32
  }
  func.func @transform_2(%arg0: i32) -> (i32, i32) {
    %c0_i32 = arith.constant 0 : i32
    %c0_i32_0 = arith.constant 0 : i32
    %c0_i32_1 = arith.constant 0 : i32
    return %c0_i32, %c0_i32_0 : i32, i32
  }
  func.func @transform_3(%arg0: i32) -> (i32, i32) {
    %c0_i32 = arith.constant 0 : i32
    %c0_i32_0 = arith.constant 0 : i32
    %c0_i32_1 = arith.constant 0 : i32
    return %c0_i32, %c0_i32_0 : i32, i32
  }
  func.func @transform_4(%arg0: i32) -> (i32, i32) {
    %c0_i32 = arith.constant 0 : i32
    %c0_i32_0 = arith.constant 0 : i32
    %c0_i32_1 = arith.constant 0 : i32
    return %c0_i32, %c0_i32_0 : i32, i32
  }
  func.func @transform_5(%arg0: i32) -> (i32, i32) {
    %c0_i32 = arith.constant 0 : i32
    %c0_i32_0 = arith.constant 0 : i32
    %c0_i32_1 = arith.constant 0 : i32
    return %c0_i32, %c0_i32_0 : i32, i32
  }
  func.func @transform_6(%arg0: i32) -> (i32, i32) {
    %c0_i32 = arith.constant 0 : i32
    %c0_i32_0 = arith.constant 0 : i32
    %c0_i32_1 = arith.constant 0 : i32
    return %c0_i32, %c0_i32_0 : i32, i32
  }
  func.func @transform_7(%arg0: i32) -> (i32, i32) {
    %c0_i32 = arith.constant 0 : i32
    %c0_i32_0 = arith.constant 0 : i32
    %c0_i32_1 = arith.constant 0 : i32
    return %c0_i32, %c0_i32_0 : i32, i32
  }
  func.func @transform_8(%arg0: i32) -> (i32, i32) {
    %c0_i32 = arith.constant 0 : i32
    %c0_i32_0 = arith.constant 0 : i32
    %c0_i32_1 = arith.constant 0 : i32
    return %c0_i32, %c0_i32_0 : i32, i32
  }
  func.func @transform_9(%arg0: i32) -> (i32, i32) {
    %c0_i32 = arith.constant 0 : i32
    %c0_i32_0 = arith.constant 0 : i32
    %c0_i32_1 = arith.constant 0 : i32
    return %c0_i32, %c0_i32_0 : i32, i32
  }
  func.func @transform_10(%arg0: i32) -> (i32, i32) {
    %c0_i32 = arith.constant 0 : i32
    %c0_i32_0 = arith.constant 0 : i32
    %c0_i32_1 = arith.constant 0 : i32
    return %c0_i32, %c0_i32_0 : i32, i32
  }
  func.func @transform_11(%arg0: i32) -> (i32, i32) {
    %c0_i32 = arith.constant 0 : i32
    %c0_i32_0 = arith.constant 0 : i32
    %c0_i32_1 = arith.constant 0 : i32
    return %c0_i32, %c0_i32_0 : i32, i32
  }
  func.func @transform_12(%arg0: i32) -> (i32, i32) {
    %c0_i32 = arith.constant 0 : i32
    %c0_i32_0 = arith.constant 0 : i32
    return %arg0, %c0_i32 : i32, i32
  }
}

</mosaic_0001>

<llo_original>
// kernel: tpu_custom_call.1
$region0: #{tpu_custom_call.1}
  #allocation0 [shape = 'u32[]', space=smem, size = 0x4, offset = 0x4, fixed_abs, tag = 'smem constant byte address 0x4 - core index']
  #allocation1 [shape = 'u32[72,128]{1,0:T(1,128)}', space=vmem, size = 0x9000, scoped, tag = 'internal scratch']
  %s0 = inlined_call_operand.vmem [shape: f32[16,1], index: 0, kind: input, shape index: {}]
  %s1 = inlined_call_operand.vmem [shape: f32[16,1], index: 1, kind: input, shape index: {}]
  %s2 = inlined_call_operand.vmem [shape: f32[1,128], index: 2, kind: input, shape index: {}]
  %s3 = inlined_call_operand.vmem [shape: f32[1,128], index: 3, kind: input, shape index: {}]
  %s4 = inlined_call_operand.vmem [shape: f32[1,128], index: 4, kind: input, shape index: {}]
  %s5 = inlined_call_operand.vmem [shape: f32[1,128], index: 5, kind: input, shape index: {}]
  %s6 = inlined_call_operand.hbm [shape: f32[128,128], index: 6, kind: input, shape index: {}]
  %s7 = inlined_call_operand.vmem [shape: f32[1,128], index: 7, kind: input, shape index: {}]
  %s8 = inlined_call_operand.hbm [shape: f32[128,128], index: 8, kind: input, shape index: {}]
  %s9 = inlined_call_operand.vmem [shape: f32[1,128], index: 9, kind: input, shape index: {}]
  %s10 = inlined_call_operand.hbm [shape: f32[128,128], index: 10, kind: input, shape index: {}]
  %s11 = inlined_call_operand.vmem [shape: f32[1,128], index: 11, kind: input, shape index: {}]
  %s12 = inlined_call_operand.hbm [shape: f32[16,128], index: 12, kind: output, shape index: {}]
  %s13 = sld [smem:[#allocation0]]
  $region93: #{tpu_custom_call.1} parent=0
    _
  %s15 = ssub.s32 1, %s13
  %s16 = scalar_select 0, %s15, %s13
  $region1: #{tpu_custom_call.1} parent=0
    #allocation2 [shape = 'u8[65536]{0}', space=vmem, size = 0x10000, scoped, tag = 'input window, operand 6, single buffered']
    #allocation3 [shape = 's32[2]{0}', space=sflag, size = 0x8, scoped, tag = 'scoped memory for tpu_custom_call.1']
    #allocation4 [shape = 's32[2]{0}', space=sflag, size = 0x8, scoped, tag = 'scoped memory for tpu_custom_call.1']
    #allocation5 [shape = 'u8[65536]{0}', space=vmem, size = 0x10000, scoped, tag = 'input window, operand 8, single buffered']
    #allocation6 [shape = 's32[1]{0}', space=sflag, size = 0x4, scoped, tag = 'scoped memory for tpu_custom_call.1']
    #allocation7 [shape = 'u8[65536]{0}', space=vmem, size = 0x10000, scoped, tag = 'input window, operand 10, single buffered']
    #allocation8 [shape = 'u8[8192]{0}', space=vmem, size = 0x2000, scoped, tag = 'output window, operand 0']
    %17 = vsyncpa [#allocation3], 0
    %18 = vsyncpa [#allocation6], 0
    %19 = vsyncpa [#allocation4], 0
    %s20 = scalar_lea.sflag [#allocation4], 1
    %21 = vsyncpa %s20, 0
    loop: start=0, step=1, limit=4
    $region2: #{tpu_custom_call.1} parent=1 // loop_pre_header
      _
    $region3: #{tpu_custom_call.1} parent=1 // loop_header
      %s23 = sphi 0, %s27
      %p24 = scmp.ge.s32.totalorder %s23, 4
      %s33 = sphi 0, %s35
      %s36 = sphi 0, %s33
      %s37 = sphi 0, %s36
      %s53 = sphi 0, %s37
      %s59 = sphi 0, %s61
      %s62 = sphi 0, %s59
      %s63 = sphi 0, %s62
      %s79 = sphi 0, %s63
      %s83 = sphi 0, %s83
      %s85 = sphi 0, %s83
      %s86 = sphi 0, %s85
      %s100 = sphi 0, %s86
      %s104 = sphi 0, %s104
      %s106 = sphi 0, %s104
      %s107 = sphi 0, %s106
      %s121 = sphi 0, %s107
      %s125 = sphi 0, %s125
      %s127 = sphi 0, %s125
      %s128 = sphi 0, %s127
      %s142 = sphi 0, %s128
      %s146 = sphi 0, %s146
      %s148 = sphi 0, %s146
      %s149 = sphi 0, %s148
      %s163 = sphi 0, %s149
      %s167 = sphi 0, %s167
      %s169 = sphi 0, %s167
      %s170 = sphi 0, %s169
      %s184 = sphi 0, %s170
      %s188 = sphi 0, %s188
      %s190 = sphi 0, %s188
      %s191 = sphi 0, %s190
      %s205 = sphi 0, %s191
      %s209 = sphi 0, %s209
      %s211 = sphi 0, %s209
      %s212 = sphi 0, %s211
      %s226 = sphi 0, %s212
      %s230 = sphi 0, %s230
      %s232 = sphi 0, %s230
      %s233 = sphi 0, %s232
      %s247 = sphi 0, %s233
      %s251 = sphi 0, %s251
      %s253 = sphi 0, %s251
      %s254 = sphi 0, %s253
      %s268 = sphi 0, %s254
      %s272 = sphi 0, %s272
      %s274 = sphi 0, %s272
      %s275 = sphi 0, %s274
      %s289 = sphi 0, %s275
      %s295 = sphi 0, %s297
      %s298 = sphi 0, %s295
      %s299 = sphi 0, %s298
      %s315 = sphi 0, %s299
    $region4: #{tpu_custom_call.1} parent=1 // loop_header_branch
      %26 = sbr.rel (%p24) target = $region8
    $region5: #{tpu_custom_call.1} parent=1 // loop_body
      %s28 = ssub.s32 %s23, 1
      %s29 = ssub.s32 %s23, 2
      %s30 = sadd.s32 %s23, 1
      %s31 = ssub.s32 %s23, %s30
      %p32 = scmp.eq.s32.totalorder %s31, 0
      %s34 = sadd.s32 %s33, 1
      %s35 = scalar_select %p32, %s33, %s34
      %p38 = pneg %p32
      %p39 = scmp.eq.s32.totalorder %s23, 1
      %p40 = por %p38, %p39
      %p41 = scmp.ne.s32.totalorder %s33, %s36
      %p42 = scmp.eq.s32.totalorder %s23, 0
      %p43 = por %p41, %p42
      %p44 = scmp.ne.s32.totalorder %s33, %s36
      %p45 = scmp.eq.s32.totalorder %s28, 1
      %p46 = por %p44, %p45
      %p47 = scmp.ne.s32.totalorder %s36, %s37
      %p48 = scmp.eq.s32.totalorder %s28, 0
      %p49 = por %p47, %p48
      %p50 = scmp.ne.s32.totalorder %s36, %s37
      %p51 = scmp.eq.s32.totalorder %s29, 1
      %p52 = por %p50, %p51
      %p54 = scmp.ne.s32.totalorder %s37, %s53
      %p55 = scmp.eq.s32.totalorder %s29, 0
      %p56 = por %p54, %p55
      %s57 = ssub.s32 %s23, %s30
      %p58 = scmp.eq.s32.totalorder %s57, 0
      %s60 = sadd.s32 %s59, 1
      %s61 = scalar_select %p58, %s59, %s60
      %p64 = pneg %p58
      %p65 = scmp.eq.s32.totalorder %s23, 1
      %p66 = por %p64, %p65
      %p67 = scmp.ne.s32.totalorder %s59, %s62
      %p68 = scmp.eq.s32.totalorder %s23, 0
      %p69 = por %p67, %p68
      %p70 = scmp.ne.s32.totalorder %s59, %s62
      %p71 = scmp.eq.s32.totalorder %s28, 1
      %p72 = por %p70, %p71
      %p73 = scmp.ne.s32.totalorder %s62, %s63
      %p74 = scmp.eq.s32.totalorder %s28, 0
      %p75 = por %p73, %p74
      %p76 = scmp.ne.s32.totalorder %s62, %s63
      %p77 = scmp.eq.s32.totalorder %s29, 1
      %p78 = por %p76, %p77
      %p80 = scmp.ne.s32.totalorder %s63, %s79
      %p81 = scmp.eq.s32.totalorder %s29, 0
      %p82 = por %p80, %p81
      %s84 = sadd.s32 %s83, 1
      %p87 = scmp.eq.s32.totalorder %s23, 1
      %p88 = scmp.ne.s32.totalorder %s83, %s85
      %p89 = scmp.eq.s32.totalorder %s23, 0
      %p90 = por %p88, %p89
      %p91 = scmp.ne.s32.totalorder %s83, %s85
      %p92 = scmp.eq.s32.totalorder %s28, 1
      %p93 = por %p91, %p92
      %p94 = scmp.ne.s32.totalorder %s85, %s86
      %p95 = scmp.eq.s32.totalorder %s28, 0
      %p96 = por %p94, %p95
      %p97 = scmp.ne.s32.totalorder %s85, %s86
      %p98 = scmp.eq.s32.totalorder %s29, 1
      %p99 = por %p97, %p98
      %p101 = scmp.ne.s32.totalorder %s86, %s100
      %p102 = scmp.eq.s32.totalorder %s29, 0
      %p103 = por %p101, %p102
      %s105 = sadd.s32 %s104, 1
      %p108 = scmp.eq.s32.totalorder %s23, 1
      %p109 = scmp.ne.s32.totalorder %s104, %s106
      %p110 = scmp.eq.s32.totalorder %s23, 0
      %p111 = por %p109, %p110
      %p112 = scmp.ne.s32.totalorder %s104, %s106
      %p113 = scmp.eq.s32.totalorder %s28, 1
      %p114 = por %p112, %p113
      %p115 = scmp.ne.s32.totalorder %s106, %s107
      %p116 = scmp.eq.s32.totalorder %s28, 0
      %p117 = por %p115, %p116
      %p118 = scmp.ne.s32.totalorder %s106, %s107
      %p119 = scmp.eq.s32.totalorder %s29, 1
      %p120 = por %p118, %p119
      %p122 = scmp.ne.s32.totalorder %s107, %s121
      %p123 = scmp.eq.s32.totalorder %s29, 0
      %p124 = por %p122, %p123
      %s126 = sadd.s32 %s125, 1
      %p129 = scmp.eq.s32.totalorder %s23, 1
      %p130 = scmp.ne.s32.totalorder %s125, %s127
      %p131 = scmp.eq.s32.totalorder %s23, 0
      %p132 = por %p130, %p131
      %p133 = scmp.ne.s32.totalorder %s125, %s127
      %p134 = scmp.eq.s32.totalorder %s28, 1
      %p135 = por %p133, %p134
      %p136 = scmp.ne.s32.totalorder %s127, %s128
      %p137 = scmp.eq.s32.totalorder %s28, 0
      %p138 = por %p136, %p137
      %p139 = scmp.ne.s32.totalorder %s127, %s128
      %p140 = scmp.eq.s32.totalorder %s29, 1
      %p141 = por %p139, %p140
      %p143 = scmp.ne.s32.totalorder %s128, %s142
      %p144 = scmp.eq.s32.totalorder %s29, 0
      %p145 = por %p143, %p144
      %s147 = sadd.s32 %s146, 1
      %p150 = scmp.eq.s32.totalorder %s23, 1
      %p151 = scmp.ne.s32.totalorder %s146, %s148
      %p152 = scmp.eq.s32.totalorder %s23, 0
      %p153 = por %p151, %p152
      %p154 = scmp.ne.s32.totalorder %s146, %s148
      %p155 = scmp.eq.s32.totalorder %s28, 1
      %p156 = por %p154, %p155
      %p157 = scmp.ne.s32.totalorder %s148, %s149
      %p158 = scmp.eq.s32.totalorder %s28, 0
      %p159 = por %p157, %p158
      %p160 = scmp.ne.s32.totalorder %s148, %s149
      %p161 = scmp.eq.s32.totalorder %s29, 1
      %p162 = por %p160, %p161
      %p164 = scmp.ne.s32.totalorder %s149, %s163
      %p165 = scmp.eq.s32.totalorder %s29, 0
      %p166 = por %p164, %p165
      %s168 = sadd.s32 %s167, 1
      %p171 = scmp.eq.s32.totalorder %s23, 1
      %p172 = scmp.ne.s32.totalorder %s167, %s169
      %p173 = scmp.eq.s32.totalorder %s23, 0
      %p174 = por %p172, %p173
      %p175 = scmp.ne.s32.totalorder %s167, %s169
      %p176 = scmp.eq.s32.totalorder %s28, 1
      %p177 = por %p175, %p176
      %p178 = scmp.ne.s32.totalorder %s169, %s170
      %p179 = scmp.eq.s32.totalorder %s28, 0
      %p180 = por %p178, %p179
      %p181 = scmp.ne.s32.totalorder %s169, %s170
      %p182 = scmp.eq.s32.totalorder %s29, 1
      %p183 = por %p181, %p182
      %p185 = scmp.ne.s32.totalorder %s170, %s184
      %p186 = scmp.eq.s32.totalorder %s29, 0
      %p187 = por %p185, %p186
      %s189 = sadd.s32 %s188, 1
      %p192 = scmp.eq.s32.totalorder %s23, 1
      %p193 = scmp.ne.s32.totalorder %s188, %s190
      %p194 = scmp.eq.s32.totalorder %s23, 0
      %p195 = por %p193, %p194
      %p196 = scmp.ne.s32.totalorder %s188, %s190
      %p197 = scmp.eq.s32.totalorder %s28, 1
      %p198 = por %p196, %p197
      %p199 = scmp.ne.s32.totalorder %s190, %s191
      %p200 = scmp.eq.s32.totalorder %s28, 0
      %p201 = por %p199, %p200
      %p202 = scmp.ne.s32.totalorder %s190, %s191
      %p203 = scmp.eq.s32.totalorder %s29, 1
      %p204 = por %p202, %p203
      %p206 = scmp.ne.s32.totalorder %s191, %s205
      %p207 = scmp.eq.s32.totalorder %s29, 0
      %p208 = por %p206, %p207
      %s210 = sadd.s32 %s209, 1
      %p213 = scmp.eq.s32.totalorder %s23, 1
      %p214 = scmp.ne.s32.totalorder %s209, %s211
      %p215 = scmp.eq.s32.totalorder %s23, 0
      %p216 = por %p214, %p215
      %p217 = scmp.ne.s32.totalorder %s209, %s211
      %p218 = scmp.eq.s32.totalorder %s28, 1
      %p219 = por %p217, %p218
      %p220 = scmp.ne.s32.totalorder %s211, %s212
      %p221 = scmp.eq.s32.totalorder %s28, 0
      %p222 = por %p220, %p221
      %p223 = scmp.ne.s32.totalorder %s211, %s212
      %p224 = scmp.eq.s32.totalorder %s29, 1
      %p225 = por %p223, %p224
      %p227 = scmp.ne.s32.totalorder %s212, %s226
      %p228 = scmp.eq.s32.totalorder %s29, 0
      %p229 = por %p227, %p228
      %s231 = sadd.s32 %s230, 1
      %p234 = scmp.eq.s32.totalorder %s23, 1
      %p235 = scmp.ne.s32.totalorder %s230, %s232
      %p236 = scmp.eq.s32.totalorder %s23, 0
      %p237 = por %p235, %p236
      %p238 = scmp.ne.s32.totalorder %s230, %s232
      %p239 = scmp.eq.s32.totalorder %s28, 1
      %p240 = por %p238, %p239
      %p241 = scmp.ne.s32.totalorder %s232, %s233
      %p242 = scmp.eq.s32.totalorder %s28, 0
      %p243 = por %p241, %p242
      %p244 = scmp.ne.s32.totalorder %s232, %s233
      %p245 = scmp.eq.s32.totalorder %s29, 1
      %p246 = por %p244, %p245
      %p248 = scmp.ne.s32.totalorder %s233, %s247
      %p249 = scmp.eq.s32.totalorder %s29, 0
      %p250 = por %p248, %p249
      %s252 = sadd.s32 %s251, 1
      %p255 = scmp.eq.s32.totalorder %s23, 1
      %p256 = scmp.ne.s32.totalorder %s251, %s253
      %p257 = scmp.eq.s32.totalorder %s23, 0
      %p258 = por %p256, %p257
      %p259 = scmp.ne.s32.totalorder %s251, %s253
      %p260 = scmp.eq.s32.totalorder %s28, 1
      %p261 = por %p259, %p260
      %p262 = scmp.ne.s32.totalorder %s253, %s254
      %p263 = scmp.eq.s32.totalorder %s28, 0
      %p264 = por %p262, %p263
      %p265 = scmp.ne.s32.totalorder %s253, %s254
      %p266 = scmp.eq.s32.totalorder %s29, 1
      %p267 = por %p265, %p266
      %p269 = scmp.ne.s32.totalorder %s254, %s268
      %p270 = scmp.eq.s32.totalorder %s29, 0
      %p271 = por %p269, %p270
      %s273 = sadd.s32 %s272, 1
      %p276 = scmp.eq.s32.totalorder %s23, 1
      %p277 = scmp.ne.s32.totalorder %s272, %s274
      %p278 = scmp.eq.s32.totalorder %s23, 0
      %p279 = por %p277, %p278
      %p280 = scmp.ne.s32.totalorder %s272, %s274
      %p281 = scmp.eq.s32.totalorder %s28, 1
      %p282 = por %p280, %p281
      %p283 = scmp.ne.s32.totalorder %s274, %s275
      %p284 = scmp.eq.s32.totalorder %s28, 0
      %p285 = por %p283, %p284
      %p286 = scmp.ne.s32.totalorder %s274, %s275
      %p287 = scmp.eq.s32.totalorder %s29, 1
      %p288 = por %p286, %p287
      %p290 = scmp.ne.s32.totalorder %s275, %s289
      %p291 = scmp.eq.s32.totalorder %s29, 0
      %p292 = por %p290, %p291
      %s293 = ssub.s32 %s23, %s30
      %p294 = scmp.eq.s32.totalorder %s293, 0
      %s296 = sadd.s32 %s295, 1
      %s297 = scalar_select %p294, %s295, %s296
      %p300 = pneg %p294
      %p301 = scmp.eq.s32.totalorder %s23, 1
      %p302 = por %p300, %p301
      %p303 = scmp.ne.s32.totalorder %s295, %s298
      %p304 = scmp.eq.s32.totalorder %s23, 0
      %p305 = por %p303, %p304
      %p306 = scmp.ne.s32.totalorder %s295, %s298
      %p307 = scmp.eq.s32.totalorder %s28, 1
      %p308 = por %p306, %p307
      %p309 = scmp.ne.s32.totalorder %s298, %s299
      %p310 = scmp.eq.s32.totalorder %s28, 0
      %p311 = por %p309, %p310
      %p312 = scmp.ne.s32.totalorder %s298, %s299
      %p313 = scmp.eq.s32.totalorder %s29, 1
      %p314 = por %p312, %p313
      %p316 = scmp.ne.s32.totalorder %s299, %s315
      %p317 = scmp.eq.s32.totalorder %s29, 0
      %p318 = por %p316, %p317
      %p319 = scmp.le.s32.totalorder 1, %s23
      %p320 = scmp.lt.s32.totalorder %s23, 3
      %p321 = pnand %p319, %p320
      %p322 = pneg %p321
      // Predicated region
      $region9: #{tpu_custom_call.1} parent=5 // pred_check
        _
      $region10: #{tpu_custom_call.1} parent=5 // pred_check_branch
        %324 = sbr.rel (%p321) target = $region12
      $region11: #{tpu_custom_call.1} parent=5 // pred_region
        %s325 = ssub.s32 %s23, 1
        // Predicated region
        $region13: #{tpu_custom_call.1} parent=11 // pred_check
          %p326 = pneg %p96
        $region14: #{tpu_custom_call.1} parent=11 // pred_check_branch
          %328 = sbr.rel (%p326) target = $region16
        $region15: #{tpu_custom_call.1} parent=11 // pred_region
          _
        $region16: #{tpu_custom_call.1} parent=11 // pred_fallthru
          _
        // Predicated region
        $region17: #{tpu_custom_call.1} parent=11 // pred_check
          %p329 = pneg %p117
        $region18: #{tpu_custom_call.1} parent=11 // pred_check_branch
          %331 = sbr.rel (%p329) target = $region20
        $region19: #{tpu_custom_call.1} parent=11 // pred_region
          _
        $region20: #{tpu_custom_call.1} parent=11 // pred_fallthru
          _
        // Predicated region
        $region21: #{tpu_custom_call.1} parent=11 // pred_check
          %p332 = pneg %p138
        $region22: #{tpu_custom_call.1} parent=11 // pred_check_branch
          %334 = sbr.rel (%p332) target = $region24
        $region23: #{tpu_custom_call.1} parent=11 // pred_region
          _
        $region24: #{tpu_custom_call.1} parent=11 // pred_fallthru
          _
        // Predicated region
        $region25: #{tpu_custom_call.1} parent=11 // pred_check
          %p335 = pneg %p159
        $region26: #{tpu_custom_call.1} parent=11 // pred_check_branch
          %337 = sbr.rel (%p335) target = $region28
        $region27: #{tpu_custom_call.1} parent=11 // pred_region
          _
        $region28: #{tpu_custom_call.1} parent=11 // pred_fallthru
          _
        // Predicated region
        $region29: #{tpu_custom_call.1} parent=11 // pred_check
          %p338 = pneg %p180
        $region30: #{tpu_custom_call.1} parent=11 // pred_check_branch
          %340 = sbr.rel (%p338) target = $region32
        $region31: #{tpu_custom_call.1} parent=11 // pred_region
          %342 = vsyncadd [#allocation3], 0
          %s343 = sshll.u32 %s6, 4
          %s344 = int_to_ptr.hbm [resolvable:$true] %s343
          %s345 = sshll.u32 [#allocation2], 4
          %s346 = int_to_ptr.vmem [resolvable:$true] %s345
          %351 = dma.hbm_to_vmem [thread:$0]  %s344, 2048, %s346, [#allocation3], 128, 128, 8
        $region32: #{tpu_custom_call.1} parent=11 // pred_fallthru
          _
        // Predicated region
        $region33: #{tpu_custom_call.1} parent=11 // pred_check
          %p352 = pneg %p201
        $region34: #{tpu_custom_call.1} parent=11 // pred_check_branch
          %354 = sbr.rel (%p352) target = $region36
        $region35: #{tpu_custom_call.1} parent=11 // pred_region
          _
        $region36: #{tpu_custom_call.1} parent=11 // pred_fallthru
          _
        // Predicated region
        $region37: #{tpu_custom_call.1} parent=11 // pred_check
          %p355 = pneg %p222
        $region38: #{tpu_custom_call.1} parent=11 // pred_check_branch
          %357 = sbr.rel (%p355) target = $region40
        $region39: #{tpu_custom_call.1} parent=11 // pred_region
          %359 = vsyncadd [#allocation6], 0
          %s360 = sshll.u32 %s8, 4
          %s361 = int_to_ptr.hbm [resolvable:$true] %s360
          %s362 = sshll.u32 [#allocation5], 4
          %s363 = int_to_ptr.vmem [resolvable:$true] %s362
          %368 = dma.hbm_to_vmem [thread:$0]  %s361, 2048, %s363, [#allocation6], 128, 128, 8
        $region40: #{tpu_custom_call.1} parent=11 // pred_fallthru
          _
        // Predicated region
        $region41: #{tpu_custom_call.1} parent=11 // pred_check
          %p369 = pneg %p243
        $region42: #{tpu_custom_call.1} parent=11 // pred_check_branch
          %371 = sbr.rel (%p369) target = $region44
        $region43: #{tpu_custom_call.1} parent=11 // pred_region
          _
        $region44: #{tpu_custom_call.1} parent=11 // pred_fallthru
          _
        // Predicated region
        $region45: #{tpu_custom_call.1} parent=11 // pred_check
          %p372 = pneg %p264
        $region46: #{tpu_custom_call.1} parent=11 // pred_check_branch
          %374 = sbr.rel (%p372) target = $region48
        $region47: #{tpu_custom_call.1} parent=11 // pred_region
          %376 = vsyncadd [#allocation6], 0
          %s377 = sshll.u32 %s10, 4
          %s378 = int_to_ptr.hbm [resolvable:$true] %s377
          %s379 = sshll.u32 [#allocation7], 4
          %s380 = int_to_ptr.vmem [resolvable:$true] %s379
          %385 = dma.hbm_to_vmem [thread:$0]  %s378, 2048, %s380, [#allocation6], 128, 128, 8
        $region48: #{tpu_custom_call.1} parent=11 // pred_fallthru
          _
        // Predicated region
        $region49: #{tpu_custom_call.1} parent=11 // pred_check
          %p386 = pneg %p285
        $region50: #{tpu_custom_call.1} parent=11 // pred_check_branch
          %388 = sbr.rel (%p386) target = $region52
        $region51: #{tpu_custom_call.1} parent=11 // pred_region
          _
        $region52: #{tpu_custom_call.1} parent=11 // pred_fallthru
          _
      $region12: #{tpu_custom_call.1} parent=5 // pred_fallthru
        _
      %p389 = scmp.lt.s32.totalorder %s23, 2
      // Predicated region
      $region53: #{tpu_custom_call.1} parent=5 // pred_check
        %p390 = pneg %p389
      $region54: #{tpu_custom_call.1} parent=5 // pred_check_branch
        %392 = sbr.rel (%p390) target = $region56
      $region55: #{tpu_custom_call.1} parent=5 // pred_region
        // Predicated region
        $region57: #{tpu_custom_call.1} parent=55 // pred_check
          %p393 = pneg %p43
        $region58: #{tpu_custom_call.1} parent=55 // pred_check_branch
          %395 = sbr.rel (%p393) target = $region60
        $region59: #{tpu_custom_call.1} parent=55 // pred_region
          %p396 = scmp.lt.s32.totalorder %s23, 1
          %s397 = scalar_select %p396, %s23, 1
          %s398 = smul.addr %s397, 8
          %s399 = scalar_lea.vmem %s0, %s398
        $region60: #{tpu_custom_call.1} parent=55 // pred_fallthru
          _
        // Predicated region
        $region61: #{tpu_custom_call.1} parent=55 // pred_check
          %p400 = pneg %p69
        $region62: #{tpu_custom_call.1} parent=55 // pred_check_branch
          %402 = sbr.rel (%p400) target = $region64
        $region63: #{tpu_custom_call.1} parent=55 // pred_region
          %p403 = scmp.lt.s32.totalorder %s23, 1
          %s404 = scalar_select %p403, %s23, 1
          %s405 = smul.addr %s404, 8
          %s406 = scalar_lea.vmem %s1, %s405
        $region64: #{tpu_custom_call.1} parent=55 // pred_fallthru
          _
      $region56: #{tpu_custom_call.1} parent=5 // pred_fallthru
        _
      %p407 = scmp.le.s32.totalorder 1, %s23
      %p408 = scmp.lt.s32.totalorder %s23, 3
      %p409 = pnand %p407, %p408
      %p410 = pneg %p409
      // Predicated region
      $region65: #{tpu_custom_call.1} parent=5 // pred_check
        _
      $region66: #{tpu_custom_call.1} parent=5 // pred_check_branch
        %412 = sbr.rel (%p409) target = $region68
      $region67: #{tpu_custom_call.1} parent=5 // pred_region
        %s413 = ssub.s32 %s23, 1
        // Predicated region
        $region69: #{tpu_custom_call.1} parent=67 // pred_check
          %p414 = pneg %p180
        $region70: #{tpu_custom_call.1} parent=67 // pred_check_branch
          %416 = sbr.rel (%p414) target = $region72
        $region71: #{tpu_custom_call.1} parent=67 // pred_region
          %418 = dma.done [#allocation3], 2048
        $region72: #{tpu_custom_call.1} parent=67 // pred_fallthru
          _
        // Predicated region
        $region73: #{tpu_custom_call.1} parent=67 // pred_check
          %p419 = pneg %p222
        $region74: #{tpu_custom_call.1} parent=67 // pred_check_branch
          %421 = sbr.rel (%p419) target = $region76
        $region75: #{tpu_custom_call.1} parent=67 // pred_region
          %423 = dma.done [#allocation6], 2048
        $region76: #{tpu_custom_call.1} parent=67 // pred_fallthru
          _
        // Predicated region
        $region77: #{tpu_custom_call.1} parent=67 // pred_check
          %p424 = pneg %p264
        $region78: #{tpu_custom_call.1} parent=67 // pred_check_branch
          %426 = sbr.rel (%p424) target = $region80
        $region79: #{tpu_custom_call.1} parent=67 // pred_region
          %428 = dma.done [#allocation6], 2048
        $region80: #{tpu_custom_call.1} parent=67 // pred_fallthru
          _
        %p429 = scmp.lt.s32.totalorder %s28, 1
        %s430 = scalar_select %p429, %s28, 1
        %s431 = smul.addr %s430, 8
        %s432 = scalar_lea.vmem %s0, %s431
        %p433 = pneg %p49
        %p434 = pneg %p46
        %p435 = scmp.lt.s32.totalorder %s28, 1
        %s436 = scalar_select %p435, %s28, 1
        %s437 = smul.addr %s436, 8
        %s438 = scalar_lea.vmem %s1, %s437
        %p439 = pneg %p75
        %p440 = pneg %p72
        %p441 = pneg %p96
        %p442 = pneg %p93
        %p443 = pneg %p117
        %p444 = pneg %p114
        %p445 = pneg %p138
        %p446 = pneg %p135
        %p447 = pneg %p159
        %p448 = pneg %p156
        %p449 = pneg %p180
        %p450 = pneg %p177
        %p451 = pneg %p201
        %p452 = pneg %p198
        %p453 = pneg %p222
        %p454 = pneg %p219
        %p455 = pneg %p243
        %p456 = pneg %p240
        %p457 = pneg %p264
        %p458 = pneg %p261
        %p459 = pneg %p285
        %p460 = pneg %p282
        %p461 = pneg %p311
        %p462 = pneg %p308
        %s463 = sand.u32 %s298, 1
        %s464 = scalar_lea.sflag [#allocation4], %s463
        %s465 = sand.u32 %s298, 1
        %s466 = smul.addr %s465, 8
        %s467 = scalar_lea.vmem [#allocation8], %s466
        %p468 = scmp.lt.s32.totalorder %s28, 1
        %s469 = scalar_select %p468, %s28, 1
        %s470 = smul.addr %s469, 8
        %s471 = scalar_lea.vmem %s0, %s470
        %p472 = scmp.lt.s32.totalorder %s28, 1
        %s473 = scalar_select %p472, %s28, 1
        %s474 = smul.addr %s473, 8
        %s475 = scalar_lea.vmem %s1, %s474
        %v476 = vld [vmem:[%s471] sm:$0xff]
        %v477 = vld [vmem:[%s475] sm:$0xff]
        %v478 = vld [vmem:[%s2] sm:$0x1]
        %480 = vset.pattern.permute.xlu0 0
        %481 = vperm.xlu0 %480, %v476
        %v482 = vpop.permute.xlu0 %481
        %v485 = vperm.slane %v478, 0
        %v487 = vmul.f32 %v482, %v485
        %v488 = vld [vmem:[%s3] sm:$0x1]
        %v490 = vperm.slane %v488, 0
        %v492 = vadd.f32 %v487, %v490
        %v493 = vld [vmem:[%s4] sm:$0x1]
        %495 = vset.pattern.permute.xlu0 0
        %496 = vperm.xlu0 %495, %v477
        %v497 = vpop.permute.xlu0 %496
        %v500 = vperm.slane %v493, 0
        %v502 = vmul.f32 %v497, %v500
        %v503 = vld [vmem:[%s5] sm:$0x1]
        %v505 = vperm.slane %v503, 0
        %v507 = vadd.f32 %v502, %v505
        %v508 = vadd.f32 %v492, %v507
        %v509 = vld [vmem:[#allocation2] sm:$0xff]
        %v510 = vld [vmem:[#allocation2 + $0x8] sm:$0xff]
        %v511 = vld [vmem:[#allocation2 + $0x10] sm:$0xff]
        %v512 = vld [vmem:[#allocation2 + $0x18] sm:$0xff]
        %v513 = vld [vmem:[#allocation2 + $0x20] sm:$0xff]
        %v514 = vld [vmem:[#allocation2 + $0x28] sm:$0xff]
        %v515 = vld [vmem:[#allocation2 + $0x30] sm:$0xff]
        %v516 = vld [vmem:[#allocation2 + $0x38] sm:$0xff]
        %v517 = vld [vmem:[#allocation2 + $0x40] sm:$0xff]
        %v518 = vld [vmem:[#allocation2 + $0x48] sm:$0xff]
        %v519 = vld [vmem:[#allocation2 + $0x50] sm:$0xff]
        %v520 = vld [vmem:[#allocation2 + $0x58] sm:$0xff]
        %v521 = vld [vmem:[#allocation2 + $0x60] sm:$0xff]
        %v522 = vld [vmem:[#allocation2 + $0x68] sm:$0xff]
        %v523 = vld [vmem:[#allocation2 + $0x70] sm:$0xff]
        %v524 = vld [vmem:[#allocation2 + $0x78] sm:$0xff]
        %v525 = vld [vmem:[%s7] sm:$0x1]
        %v527 = vperm.slane %v525, 0
        %529 = vmatpush.msra.mxu0 %v524
        %530 = vmatpush.msra.mxu0 %v523
        %531 = vmatpush.msra.mxu0 %v522
        %532 = vmatpush.msra.mxu0 %v521
        %533 = vmatpush.msra.mxu0 %v520
        %534 = vmatpush.msra.mxu0 %v519
        %535 = vmatpush.msra.mxu0 %v518
        %536 = vmatpush.msra.mxu0 %v517
        %537 = vmatpush.msra.mxu0 %v516
        %538 = vmatpush.msra.mxu0 %v515
        %539 = vmatpush.msra.mxu0 %v514
        %540 = vmatpush.msra.mxu0 %v513
        %541 = vmatpush.msra.mxu0 %v512
        %542 = vmatpush.msra.mxu0 %v511
        %543 = vmatpush.msra.mxu0 %v510
        %544 = vmatpush.msra.mxu0 %v509
        %545 = vmatmul.f32.gmra.mxu0 %v508
        %v546 = vpop.f32.mrf.mxu0
        %v547 = vadd.f32 %v527, %v546
        %548 = vdwg.mxu0
        %v549 = vmax.f32 %v547, 0.0
        %v550 = vld [vmem:[#allocation5] sm:$0xff]
        %v551 = vld [vmem:[#allocation5 + $0x8] sm:$0xff]
        %v552 = vld [vmem:[#allocation5 + $0x10] sm:$0xff]
        %v553 = vld [vmem:[#allocation5 + $0x18] sm:$0xff]
        %v554 = vld [vmem:[#allocation5 + $0x20] sm:$0xff]
        %v555 = vld [vmem:[#allocation5 + $0x28] sm:$0xff]
        %v556 = vld [vmem:[#allocation5 + $0x30] sm:$0xff]
        %v557 = vld [vmem:[#allocation5 + $0x38] sm:$0xff]
        %v558 = vld [vmem:[#allocation5 + $0x40] sm:$0xff]
        %v559 = vld [vmem:[#allocation5 + $0x48] sm:$0xff]
        %v560 = vld [vmem:[#allocation5 + $0x50] sm:$0xff]
        %v561 = vld [vmem:[#allocation5 + $0x58] sm:$0xff]
        %v562 = vld [vmem:[#allocation5 + $0x60] sm:$0xff]
        %v563 = vld [vmem:[#allocation5 + $0x68] sm:$0xff]
        %v564 = vld [vmem:[#allocation5 + $0x70] sm:$0xff]
        %v565 = vld [vmem:[#allocation5 + $0x78] sm:$0xff]
        %v566 = vld [vmem:[%s9] sm:$0x1]
        %v568 = vperm.slane %v566, 0
        %570 = vmatpush.msra.mxu0 %v565
        %571 = vmatpush.msra.mxu0 %v564
        %572 = vmatpush.msra.mxu0 %v563
        %573 = vmatpush.msra.mxu0 %v562
        %574 = vmatpush.msra.mxu0 %v561
        %575 = vmatpush.msra.mxu0 %v560
        %576 = vmatpush.msra.mxu0 %v559
        %577 = vmatpush.msra.mxu0 %v558
        %578 = vmatpush.msra.mxu0 %v557
        %579 = vmatpush.msra.mxu0 %v556
        %580 = vmatpush.msra.mxu0 %v555
        %581 = vmatpush.msra.mxu0 %v554
        %582 = vmatpush.msra.mxu0 %v553
        %583 = vmatpush.msra.mxu0 %v552
        %584 = vmatpush.msra.mxu0 %v551
        %585 = vmatpush.msra.mxu0 %v550
        %586 = vmatmul.f32.gmra.mxu0 %v549
        %v587 = vpop.f32.mrf.mxu0
        %v588 = vadd.f32 %v568, %v587
        %589 = vdwg.mxu0
        %v590 = vmax.f32 %v588, 0.0
        %v591 = vld [vmem:[#allocation7] sm:$0xff]
        %v592 = vld [vmem:[#allocation7 + $0x8] sm:$0xff]
        %v593 = vld [vmem:[#allocation7 + $0x10] sm:$0xff]
        %v594 = vld [vmem:[#allocation7 + $0x18] sm:$0xff]
        %v595 = vld [vmem:[#allocation7 + $0x20] sm:$0xff]
        %v596 = vld [vmem:[#allocation7 + $0x28] sm:$0xff]
        %v597 = vld [vmem:[#allocation7 + $0x30] sm:$0xff]
        %v598 = vld [vmem:[#allocation7 + $0x38] sm:$0xff]
        %v599 = vld [vmem:[#allocation7 + $0x40] sm:$0xff]
        %v600 = vld [vmem:[#allocation7 + $0x48] sm:$0xff]
        %v601 = vld [vmem:[#allocation7 + $0x50] sm:$0xff]
        %v602 = vld [vmem:[#allocation7 + $0x58] sm:$0xff]
        %v603 = vld [vmem:[#allocation7 + $0x60] sm:$0xff]
        %v604 = vld [vmem:[#allocation7 + $0x68] sm:$0xff]
        %v605 = vld [vmem:[#allocation7 + $0x70] sm:$0xff]
        %v606 = vld [vmem:[#allocation7 + $0x78] sm:$0xff]
        %v607 = vld [vmem:[%s11] sm:$0x1]
        %v609 = vperm.slane %v607, 0
        %611 = vmatpush.msra.mxu0 %v606
        %612 = vmatpush.msra.mxu0 %v605
        %613 = vmatpush.msra.mxu0 %v604
        %614 = vmatpush.msra.mxu0 %v603
        %615 = vmatpush.msra.mxu0 %v602
        %616 = vmatpush.msra.mxu0 %v601
        %617 = vmatpush.msra.mxu0 %v600
        %618 = vmatpush.msra.mxu0 %v599
        %619 = vmatpush.msra.mxu0 %v598
        %620 = vmatpush.msra.mxu0 %v597
        %621 = vmatpush.msra.mxu0 %v596
        %622 = vmatpush.msra.mxu0 %v595
        %623 = vmatpush.msra.mxu0 %v594
        %624 = vmatpush.msra.mxu0 %v593
        %625 = vmatpush.msra.mxu0 %v592
        %626 = vmatpush.msra.mxu0 %v591
        %627 = vmatmul.f32.gmra.mxu0 %v590
        %v628 = vpop.f32.mrf.mxu0
        %v629 = vadd.f32 %v609, %v628
        %630 = vdwg.mxu0
        %631 = vst [vmem:[%s467] sm:$0xff] %v629
        %s632 = sand.u32 %s298, 1
        %s633 = scalar_lea.sflag [#allocation4], %s632
        %s634 = sand.u32 %s298, 1
        %s635 = smul.addr %s634, 8
        %s636 = scalar_lea.vmem [#allocation8], %s635
        // Predicated region
        $region81: #{tpu_custom_call.1} parent=67 // pred_check
          %p637 = pneg %p308
        $region82: #{tpu_custom_call.1} parent=67 // pred_check_branch
          %639 = sbr.rel (%p637) target = $region84
        $region83: #{tpu_custom_call.1} parent=67 // pred_region
          %641 = vsyncadd %s633, 0
          %s642 = smul.addr %s28, 8
          %s643 = scalar_lea.hbm %s12, %s642
          %s645 = sshll.u32 %s636, 4
          %s646 = int_to_ptr.vmem [resolvable:$true] %s645
          %s647 = sshll.u32 %s643, 4
          %s648 = int_to_ptr.hbm [resolvable:$true] %s647
          %650 = dma.vmem_to_hbm [thread:$0]  %s646, 128, %s648, %s633
        $region84: #{tpu_custom_call.1} parent=67 // pred_fallthru
          _
      $region68: #{tpu_custom_call.1} parent=5 // pred_fallthru
        _
      %p651 = scmp.le.s32.totalorder 2, %s23
      // Predicated region
      $region85: #{tpu_custom_call.1} parent=5 // pred_check
        %p652 = pneg %p651
      $region86: #{tpu_custom_call.1} parent=5 // pred_check_branch
        %654 = sbr.rel (%p652) target = $region88
      $region87: #{tpu_custom_call.1} parent=5 // pred_region
        %s655 = ssub.s32 %s23, 2
        // Predicated region
        $region89: #{tpu_custom_call.1} parent=87 // pred_check
          %p656 = pneg %p314
        $region90: #{tpu_custom_call.1} parent=87 // pred_check_branch
          %658 = sbr.rel (%p656) target = $region92
        $region91: #{tpu_custom_call.1} parent=87 // pred_region
          %s659 = sand.u32 %s299, 1
          %s660 = scalar_lea.sflag [#allocation4], %s659
          %s661 = sand.u32 %s299, 1
          %s662 = smul.addr %s661, 8
          %s663 = scalar_lea.vmem [#allocation8], %s662
          %665 = dma.done %s660, 128
        $region92: #{tpu_custom_call.1} parent=87 // pred_fallthru
          _
      $region88: #{tpu_custom_call.1} parent=5 // pred_fallthru
        _
    $region6: #{tpu_custom_call.1} parent=1 // loop_footer
      %s27 = sadd.s32 1, %s23
    $region7: #{tpu_custom_call.1} parent=1 // loop_footer_branch
      %22 = sbr.rel target = $region3
    $region8: #{tpu_custom_call.1} parent=1 // loop_exit
      _
    %666 = vsyncpa [#allocation3], 1
    %s667 = scalar_lea.sflag [#allocation3], 1
    %668 = vsyncpa %s667, 1
    %669 = vsyncpa [#allocation6], 1
    %670 = vsyncpa [#allocation4], 1
    %s671 = scalar_lea.sflag [#allocation4], 1
    %672 = vsyncpa %s671, 1

</llo_original>
